<compile_context>
chip_gen: v7x
topology: tpu7x:2x2x1
jax: 0.10.0
libtpu: 0.0.40
codegen_flags: <defaults>
</compile_context>

<pallas_src>
import jax
import jax.numpy as jnp
from jax.experimental import pallas as pl
from jax.experimental.pallas import tpu as pltpu


def _identity_kernel(x_ref, o_ref):
    # Pure pass-through: copy the current VMEM tile to the output tile.
    o_ref[...] = x_ref[...]


def identity(x: jax.Array) -> jax.Array:
    """Identity forward pass implemented as a Pallas TPU copy kernel."""
    if x.size == 0:
        return x

    orig_shape = x.shape
    total = x.size
    nbytes = total * x.dtype.itemsize
    cost = pl.CostEstimate(flops=0, transcendentals=0, bytes_accessed=2 * nbytes)

    flat = x.reshape(-1)

    # Pick the widest lane-dense last dim (multiple of 128) that divides the
    # total element count.  Contiguous row-major reshape is free.
    lane = None
    for cand in (1024, 512, 256, 128):
        if total % cand == 0:
            lane = cand
            break

    if lane is None:
        # Tiny / irregular size: single full-array block (always legal).
        x2d = flat.reshape(1, total)
        out = pl.pallas_call(
            _identity_kernel,
            out_shape=jax.ShapeDtypeStruct((1, total), x2d.dtype),
            grid=(1,),
            in_specs=[pl.BlockSpec((1, total), lambda i: (0, 0))],
            out_specs=pl.BlockSpec((1, total), lambda i: (0, 0)),
            input_output_aliases={0: 0},
            cost_estimate=cost,
        )(x2d)
        return out.reshape(orig_shape)

    M = total // lane
    x2d = flat.reshape(M, lane)

    # ~2 MiB tiles: with double-buffered input and output (4x tile bytes live)
    # this stays well under the scoped-VMEM default on v5e (16 MiB) and
    # v6e/v7x (32 MiB), while being large enough to amortize the ~0.35 us
    # per-grid-step overhead against HBM bandwidth.
    bytes_per_row = lane * x2d.dtype.itemsize
    tile_m = max(8, (2 * 1024 * 1024) // bytes_per_row)
    tile_m = (tile_m // 8) * 8  # keep the sublane dim a multiple of 8
    if tile_m >= M:
        tile_m = M  # full-extent block is always legal
    grid_m = pl.cdiv(M, tile_m)

    out2d = pl.pallas_call(
        _identity_kernel,
        out_shape=jax.ShapeDtypeStruct((M, lane), x2d.dtype),
        grid=(grid_m,),
        in_specs=[pl.BlockSpec((tile_m, lane), lambda i: (i, 0))],
        out_specs=pl.BlockSpec((tile_m, lane), lambda i: (i, 0)),
        input_output_aliases={0: 0},  # reuse the input HBM buffer for the output
        cost_estimate=cost,
        compiler_params=pltpu.CompilerParams(
            # Embarrassingly parallel copy: let v7x shard the grid across its
            # two TensorCores (harmless on single-TC v5e/v6e).
            dimension_semantics=("parallel",),
        ),
    )(x2d)

    return out2d.reshape(orig_shape)


if __name__ == "__main__":
    key = jax.random.PRNGKey(0)
    # Small NCHW shape consistent with the module's expected image input.
    x = jax.random.uniform(key, (2, 4, 16, 16), dtype=jnp.float32)

    # Host reference kept before donation invalidates the device buffer.
    x_host = jax.device_get(x)

    # Donate the input so the aliased output truly reuses its HBM buffer.
    identity_fn = jax.jit(identity, donate_argnums=(0,))
    y = identity_fn(x)
    jax.block_until_ready(y)

    assert y.shape == x_host.shape
    assert str(y.dtype) == str(x_host.dtype)
    assert bool((jax.device_get(y) == x_host).all())

    print("KERNEL_OK")
</pallas_src>

<mosaic_0001>
module attributes {stable_mosaic.version = 11 : i64} {
  func.func @_identity_kernel(%arg0: i32, %arg1: memref<2x1024xf32, #tpu.memory_space<vmem>>, %arg2: memref<2x1024xf32, #tpu.memory_space<vmem>>) attributes {dimension_semantics = [#tpu.dimension_semantics<parallel>], iteration_bounds = array<i64: 1>, scalar_prefetch = 0 : i64, scratch_operands = 0 : i64, tpu.core_type = #tpu.core_type<tc>, window_params = [{transform_indices = @transform_0, window_bounds = array<i64: 2, 1024>}, {transform_indices = @transform_1, window_bounds = array<i64: 2, 1024>}]} {
    %c0 = arith.constant 0 : index
    %c0_0 = arith.constant 0 : index
    %0 = vector.load %arg1[%c0, %c0_0] : memref<2x1024xf32, #tpu.memory_space<vmem>>, vector<2x1024xf32>
    %c0_1 = arith.constant 0 : index
    %c0_2 = arith.constant 0 : index
    %1 = vector.load %arg2[%c0_1, %c0_2] : memref<2x1024xf32, #tpu.memory_space<vmem>>, vector<2x1024xf32>
    tpu.vector_store %arg2[%c0_1, %c0_2], %0 {strides = array<i32>} : memref<2x1024xf32, #tpu.memory_space<vmem>>, vector<2x1024xf32>,
    return
  }
  func.func @transform_0(%arg0: i32) -> (i32, i32) {
    %c0_i32 = arith.constant 0 : i32
    %c0_i32_0 = arith.constant 0 : i32
    return %arg0, %c0_i32 : i32, i32
  }
  func.func @transform_1(%arg0: i32) -> (i32, i32) {
    %c0_i32 = arith.constant 0 : i32
    %c0_i32_0 = arith.constant 0 : i32
    return %arg0, %c0_i32 : i32, i32
  }
}

</mosaic_0001>

<llo_original>
// kernel: identity.1
$region0: #{identity.1}
  #allocation0 [shape = 'u32[]', space=smem, size = 0x4, offset = 0x4, fixed_abs, tag = 'smem constant byte address 0x4 - core index']
  #allocation1 [shape = 'u32[144,128]{1,0:T(1,128)}', space=vmem, size = 0x12000, scoped, tag = 'internal scratch']
  %s0 = inlined_call_operand.vmem [shape: f32[2,1024], index: 0, kind: input, shape index: {}, may-alias: {0,1}]
  %s1 = inlined_call_operand.vmem [shape: f32[2,1024], index: 1, kind: output, shape index: {}, may-alias: {0,1}]
  %s2 = sld [smem:[#allocation0]]
  $region14: #{identity.1} parent=0
    _
  %s4 = ssub.s32 1, %s2
  %s5 = scalar_select 0, %s4, %s2
  // Predicated region
  $region2: #{identity.1} parent=0 // pred_check
    _
  $region3: #{identity.1} parent=0 // pred_check_branch
    %7 = sbr.rel (0) target = $region5
  $region4: #{identity.1} parent=0 // pred_region
    _
  $region5: #{identity.1} parent=0 // pred_fallthru
    _
  %v8 = vld [vmem:[%s0] sm:$0xff]
  %v9 = vld [vmem:[%s0 + $0x8] sm:$0xff]
  %10 = vst [vmem:[%s1] sm:$0xff] %v8
  %11 = vst [vmem:[%s1 + $0x8] sm:$0xff] %v9
  // Predicated region
  $region6: #{identity.1} parent=0 // pred_check
    _
  $region7: #{identity.1} parent=0 // pred_check_branch
    %13 = sbr.rel (0) target = $region9
  $region8: #{identity.1} parent=0 // pred_region
    _
  $region9: #{identity.1} parent=0 // pred_fallthru
    _
  // Predicated region
  $region10: #{identity.1} parent=0 // pred_check
    _
  $region11: #{identity.1} parent=0 // pred_check_branch
    %15 = sbr.rel (0) target = $region13
  $region12: #{identity.1} parent=0 // pred_region
    _
  $region13: #{identity.1} parent=0 // pred_fallthru
    _

</llo_original>
